<compile_context>
chip_gen: v6e
topology: v6e:2x2x1
jax: 0.10.0
libtpu: 0.0.40
codegen_flags: <defaults>
</compile_context>

<pallas_src>
import jax
import jax.numpy as jnp
from jax.experimental import pallas as pl
from jax.experimental.pallas import tpu as pltpu

IN_DIM = 3
HID_DIM = 64
OUT_DIM = 1

_MAX_TILE = 8192   # max batch rows per grid step (VMEM-budgeted, see header)
_CHUNK = 2048      # rows per in-kernel sub-chunk (bounds the (chunk, 64) h tile)


def _round_up(x, m):
    return ((x + m - 1) // m) * m


def _make_kernel(tb: int, chunk: int):
    """Kernel closure over the (static) batch-tile and inner chunk sizes."""

    def kernel(x_ref, w1_ref, b1_ref, w2_ref, b2_ref, o_ref):
        # x_ref : (tb, IN_DIM)        batch on sublanes, features on lanes
        # w1_ref: (IN_DIM, HID_DIM)   pre-transposed (in, out)
        # b1_ref: (1, HID_DIM)
        # w2_ref: (HID_DIM, OUT_DIM)
        # b2_ref: (1, OUT_DIM)
        # o_ref : (tb, OUT_DIM)
        w1 = w1_ref[...]
        b1 = b1_ref[...]
        w2 = w2_ref[...]
        b2 = b2_ref[...]

        # Chunk the hidden activation so live VMEM is ~(chunk, 64) instead of
        # (tb, 64).  tb and chunk are static, so these are static slices.
        for r in range(0, tb, chunk):
            c = min(chunk, tb - r)
            x = x_ref[r:r + c, :]                                   # (c, 3)
            h = jnp.dot(x, w1, preferred_element_type=jnp.float32)  # (c, 64)
            h = jnp.maximum(h + b1, 0.0)
            y = jnp.dot(h, w2, preferred_element_type=jnp.float32)  # (c, 1)
            o_ref[r:r + c, :] = (y + b2).astype(o_ref.dtype)

    return kernel


def simple_nn_forward(x, w1, b1, w2, b2, *, max_tile=_MAX_TILE, chunk=_CHUNK):
    """x: (B, 3) f32; w1: (64, 3); b1: (64,); w2: (1, 64); b2: (1,) -> (B, 1)."""
    B = x.shape[0]
    assert x.shape[1] == IN_DIM

    # Batch tile: multiple of 8 sublanes.  Aim for >= 2 tiles (helps v7x's two
    # TensorCores) when the batch allows, capped at the VMEM-budgeted max_tile.
    tb = min(_round_up(max_tile, 8), _round_up(max(-(-B // 2), 1), 8))
    tb = max(tb, 8)
    n_tiles = pl.cdiv(B, tb)

    # Tiny one-time relayouts of the parameters only (O(hundreds of bytes)).
    w1_t = w1.T                      # (IN_DIM, HID_DIM)
    w2_t = w2.T                      # (HID_DIM, OUT_DIM)
    b1_2d = b1.reshape(1, HID_DIM)
    b2_2d = b2.reshape(1, OUT_DIM)

    cost = pl.CostEstimate(
        flops=2 * B * (IN_DIM * HID_DIM + HID_DIM * OUT_DIM),
        transcendentals=0,
        bytes_accessed=4 * (B * (IN_DIM + OUT_DIM)
                            + IN_DIM * HID_DIM + HID_DIM
                            + HID_DIM * OUT_DIM + OUT_DIM),
    )

    return pl.pallas_call(
        _make_kernel(tb, chunk),
        out_shape=jax.ShapeDtypeStruct((B, OUT_DIM), jnp.float32),
        grid=(n_tiles,),
        in_specs=[
            pl.BlockSpec((tb, IN_DIM), lambda i: (i, 0)),         # x (batch-tiled)
            pl.BlockSpec((IN_DIM, HID_DIM), lambda i: (0, 0)),    # w1^T (resident)
            pl.BlockSpec((1, HID_DIM), lambda i: (0, 0)),         # b1   (resident)
            pl.BlockSpec((HID_DIM, OUT_DIM), lambda i: (0, 0)),   # w2^T (resident)
            pl.BlockSpec((1, OUT_DIM), lambda i: (0, 0)),         # b2   (resident)
        ],
        out_specs=pl.BlockSpec((tb, OUT_DIM), lambda i: (i, 0)),
        compiler_params=pltpu.CompilerParams(
            dimension_semantics=("parallel",),       # batch tiles across TCs (v7x)
            vmem_limit_bytes=40 * 1024 * 1024,       # explicit budget, all gens
        ),
        cost_estimate=cost,
    )(x, w1_t, b1_2d, w2_t, b2_2d)


def init_params(key):
    """PyTorch-style Linear init: U(-1/sqrt(fan_in), 1/sqrt(fan_in)).

    Weights are kept in torch's (out_features, in_features) layout.
    """
    k1, k2, k3, k4 = jax.random.split(key, 4)
    bound1 = 1.0 / (IN_DIM ** 0.5)
    bound2 = 1.0 / (HID_DIM ** 0.5)
    w1 = jax.random.uniform(k1, (HID_DIM, IN_DIM), jnp.float32, -bound1, bound1)
    b1 = jax.random.uniform(k2, (HID_DIM,), jnp.float32, -bound1, bound1)
    w2 = jax.random.uniform(k3, (OUT_DIM, HID_DIM), jnp.float32, -bound2, bound2)
    b2 = jax.random.uniform(k4, (OUT_DIM,), jnp.float32, -bound2, bound2)
    return w1, b1, w2, b2


if __name__ == "__main__":
    key = jax.random.PRNGKey(0)
    kx, kp = jax.random.split(key)
    w1, b1, w2, b2 = init_params(kp)

    def ref_fn(xv):
        return jnp.maximum(xv @ w1.T + b1, 0.0) @ w2.T + b2

    # Small batch, a ragged batch (not a multiple of 8/tile), and a multi-tile
    # batch that exercises the chunked inner loop and the masked boundary block.
    for B in (8, 300, 20000):
        x = jax.random.normal(jax.random.fold_in(kx, B), (B, IN_DIM),
                              dtype=jnp.float32)
        out = jax.block_until_ready(simple_nn_forward(x, w1, b1, w2, b2))
        ref = ref_fn(x)
        assert out.shape == (B, OUT_DIM)
        assert jnp.allclose(out, ref, atol=1e-4, rtol=1e-4), f"mismatch at B={B}"

    print("KERNEL_OK")
</pallas_src>

<mosaic_0001>
module attributes {stable_mosaic.version = 11 : i64} {
  func.func @kernel(%arg0: i32, %arg1: memref<8x3xf32, #tpu.memory_space<vmem>>, %arg2: memref<3x64xf32, #tpu.memory_space<vmem>>, %arg3: memref<1x64xf32, #tpu.memory_space<vmem>>, %arg4: memref<64x1xf32, #tpu.memory_space<vmem>>, %arg5: memref<1x1xf32, #tpu.memory_space<vmem>>, %arg6: memref<8x1xf32, #tpu.memory_space<vmem>>) attributes {dimension_semantics = [#tpu.dimension_semantics<parallel>], iteration_bounds = array<i64: 1>, scalar_prefetch = 0 : i64, scratch_operands = 0 : i64, tpu.core_type = #tpu.core_type<tc>, window_params = [{transform_indices = @transform_0, window_bounds = array<i64: 8, 3>}, {pipeline_mode = #tpu.pipeline_mode<synchronous>, transform_indices = @transform_1, window_bounds = array<i64: 3, 64>}, {pipeline_mode = #tpu.pipeline_mode<synchronous>, transform_indices = @transform_2, window_bounds = array<i64: 1, 64>}, {pipeline_mode = #tpu.pipeline_mode<synchronous>, transform_indices = @transform_3, window_bounds = array<i64: 64, 1>}, {pipeline_mode = #tpu.pipeline_mode<synchronous>, transform_indices = @transform_4, window_bounds = array<i64: 1, 1>}, {transform_indices = @transform_5, window_bounds = array<i64: 8, 1>}]} {
    %c0 = arith.constant 0 : index
    %c0_0 = arith.constant 0 : index
    %0 = vector.load %arg2[%c0, %c0_0] : memref<3x64xf32, #tpu.memory_space<vmem>>, vector<3x64xf32>
    %c0_1 = arith.constant 0 : index
    %c0_2 = arith.constant 0 : index
    %1 = vector.load %arg3[%c0_1, %c0_2] : memref<1x64xf32, #tpu.memory_space<vmem>>, vector<1x64xf32>
    %c0_3 = arith.constant 0 : index
    %c0_4 = arith.constant 0 : index
    %2 = vector.load %arg4[%c0_3, %c0_4] : memref<64x1xf32, #tpu.memory_space<vmem>>, vector<64x1xf32>
    %c0_5 = arith.constant 0 : index
    %c0_6 = arith.constant 0 : index
    %3 = vector.load %arg5[%c0_5, %c0_6] : memref<1x1xf32, #tpu.memory_space<vmem>>, vector<1x1xf32>
    %c0_7 = arith.constant 0 : index
    %c0_8 = arith.constant 0 : index
    %4 = vector.load %arg1[%c0_7, %c0_8] : memref<8x3xf32, #tpu.memory_space<vmem>>, vector<8x3xf32>
    %cst = arith.constant dense<0.000000e+00> : vector<8x64xf32>
    %5 = tpu.matmul %4, %0, %cst {dimension_numbers = #tpu.dot_dimension_numbers<[1], [0], [0], [1], [0, 0, 1, 1], [], []>} : vector<8x3xf32>, vector<3x64xf32>, vector<8x64xf32> -> vector<8x64xf32>
    %6 = vector.broadcast %1 : vector<1x64xf32> to vector<8x64xf32>
    %7 = arith.addf %5, %6 : vector<8x64xf32>
    %cst_9 = arith.constant 0.000000e+00 : f32
    %8 = vector.broadcast %cst_9 : f32 to vector<8x64xf32>
    %9 = arith.maximumf %7, %8 : vector<8x64xf32>
    %cst_10 = arith.constant dense<0.000000e+00> : vector<8x1xf32>
    %10 = tpu.matmul %9, %2, %cst_10 {dimension_numbers = #tpu.dot_dimension_numbers<[1], [0], [0], [1], [0, 0, 1, 1], [], []>} : vector<8x64xf32>, vector<64x1xf32>, vector<8x1xf32> -> vector<8x1xf32>
    %11 = vector.broadcast %3 : vector<1x1xf32> to vector<8x1xf32>
    %12 = arith.addf %10, %11 : vector<8x1xf32>
    %c0_11 = arith.constant 0 : index
    %c0_12 = arith.constant 0 : index
    %13 = vector.load %arg6[%c0_11, %c0_12] : memref<8x1xf32, #tpu.memory_space<vmem>>, vector<8x1xf32>
    tpu.vector_store %arg6[%c0_11, %c0_12], %12 {strides = array<i32>} : memref<8x1xf32, #tpu.memory_space<vmem>>, vector<8x1xf32>,
    return
  }
  func.func @transform_0(%arg0: i32) -> (i32, i32) {
    %c0_i32 = arith.constant 0 : i32
    %c0_i32_0 = arith.constant 0 : i32
    return %arg0, %c0_i32 : i32, i32
  }
  func.func @transform_1(%arg0: i32) -> (i32, i32) {
    %c0_i32 = arith.constant 0 : i32
    %c0_i32_0 = arith.constant 0 : i32
    %c0_i32_1 = arith.constant 0 : i32
    return %c0_i32, %c0_i32_0 : i32, i32
  }
  func.func @transform_2(%arg0: i32) -> (i32, i32) {
    %c0_i32 = arith.constant 0 : i32
    %c0_i32_0 = arith.constant 0 : i32
    %c0_i32_1 = arith.constant 0 : i32
    return %c0_i32, %c0_i32_0 : i32, i32
  }
  func.func @transform_3(%arg0: i32) -> (i32, i32) {
    %c0_i32 = arith.constant 0 : i32
    %c0_i32_0 = arith.constant 0 : i32
    %c0_i32_1 = arith.constant 0 : i32
    return %c0_i32, %c0_i32_0 : i32, i32
  }
  func.func @transform_4(%arg0: i32) -> (i32, i32) {
    %c0_i32 = arith.constant 0 : i32
    %c0_i32_0 = arith.constant 0 : i32
    %c0_i32_1 = arith.constant 0 : i32
    return %c0_i32, %c0_i32_0 : i32, i32
  }
  func.func @transform_5(%arg0: i32) -> (i32, i32) {
    %c0_i32 = arith.constant 0 : i32
    %c0_i32_0 = arith.constant 0 : i32
    return %arg0, %c0_i32 : i32, i32
  }
}

</mosaic_0001>

<llo_original>
// kernel: tpu_custom_call.1
$region0: #{tpu_custom_call.1}
  #allocation0 [shape = 'u32[]', space=smem, size = 0x4, offset = 0x4, fixed_abs, tag = 'smem constant byte address 0x4 - core index']
  #allocation1 [shape = 'u32[144,128]{1,0:T(1,128)}', space=vmem, size = 0x12000, scoped, tag = 'internal scratch']
  #allocation2 [shape = 'f32[1,1]{1,0:T(1,128)S(1)}', space=vmem, size = 0x200, scoped, tag = 'scoped memory for tpu_custom_call.1']
  %s0 = inlined_call_operand.vmem [shape: f32[8,3], index: 0, kind: input, shape index: {}]
  %s1 = inlined_call_operand.vmem [shape: f32[3,64], index: 1, kind: input, shape index: {}]
  %s2 = inlined_call_operand.vmem [shape: f32[1,64], index: 2, kind: input, shape index: {}]
  %s3 = inlined_call_operand.vmem [shape: f32[64,1], index: 3, kind: input, shape index: {}]
  %s4 = inlined_call_operand.<no memory space> [shape: f32[1,1], index: 4, kind: input, shape index: {}]
  %s5 = inlined_call_operand.vmem [shape: f32[8,1], index: 5, kind: output, shape index: {}]
  %s6 = sld [smem:[#allocation0]]
  $region30: #{tpu_custom_call.1} parent=0
    _
  %s8 = ssub.s32 1, %s6
  %s9 = scalar_select 0, %s8, %s6
  %v10 = vstv %s4
  %11 = vst [vmem:[#allocation2] sm:$0x1] %v10
  // Predicated region
  $region2: #{tpu_custom_call.1} parent=0 // pred_check
    _
  $region3: #{tpu_custom_call.1} parent=0 // pred_check_branch
    %13 = sbr.rel (0) target = $region5
  $region4: #{tpu_custom_call.1} parent=0 // pred_region
    _
  $region5: #{tpu_custom_call.1} parent=0 // pred_fallthru
    _
  // Predicated region
  $region6: #{tpu_custom_call.1} parent=0 // pred_check
    _
  $region7: #{tpu_custom_call.1} parent=0 // pred_check_branch
    %15 = sbr.rel (0) target = $region9
  $region8: #{tpu_custom_call.1} parent=0 // pred_region
    _
  $region9: #{tpu_custom_call.1} parent=0 // pred_fallthru
    _
  // Predicated region
  $region10: #{tpu_custom_call.1} parent=0 // pred_check
    _
  $region11: #{tpu_custom_call.1} parent=0 // pred_check_branch
    %17 = sbr.rel (0) target = $region13
  $region12: #{tpu_custom_call.1} parent=0 // pred_region
    _
  $region13: #{tpu_custom_call.1} parent=0 // pred_fallthru
    _
  // Predicated region
  $region14: #{tpu_custom_call.1} parent=0 // pred_check
    _
  $region15: #{tpu_custom_call.1} parent=0 // pred_check_branch
    %19 = sbr.rel (0) target = $region17
  $region16: #{tpu_custom_call.1} parent=0 // pred_region
    _
  $region17: #{tpu_custom_call.1} parent=0 // pred_fallthru
    _
  // Predicated region
  $region18: #{tpu_custom_call.1} parent=0 // pred_check
    _
  $region19: #{tpu_custom_call.1} parent=0 // pred_check_branch
    %21 = sbr.rel (0) target = $region21
  $region20: #{tpu_custom_call.1} parent=0 // pred_region
    _
  $region21: #{tpu_custom_call.1} parent=0 // pred_fallthru
    _
  %v22 = vld [vmem:[%s1] sm:$0x7]
  %v23 = vld [vmem:[%s2] sm:$0x1]
  %v24 = vld [vmem:[%s3] sm:$0xff]
  %v25 = vld [vmem:[%s3 + $0x8] sm:$0xff]
  %v26 = vld [vmem:[%s3 + $0x10] sm:$0xff]
  %v27 = vld [vmem:[%s3 + $0x18] sm:$0xff]
  %v28 = vld [vmem:[%s3 + $0x20] sm:$0xff]
  %v29 = vld [vmem:[%s3 + $0x28] sm:$0xff]
  %v30 = vld [vmem:[%s3 + $0x30] sm:$0xff]
  %v31 = vld [vmem:[%s3 + $0x38] sm:$0xff]
  %v32 = vld [vmem:[#allocation2] sm:$0x1]
  %v33 = vld [vmem:[%s0] sm:$0xff]
  %v35 = vlaneseq
  %v36 = vshrl.u32 %v35, 7
  %v37 = vsub.s32 0, %v36
  %v38 = vrot.slane %v23, %v37
  %vm40 = vcmask 23552
  %v42 = vsel %vm40, %v33, 0
  %vm44 = vcmask 1042432
  %v46 = vsel %vm44, %v22, 0
  %48 = vmatprep.subr.mxu0 0.0
  %49 = vmatpush1.msra.mxu0 0.0
  %50 = vmatprep.subr.mxu0 0.0
  %51 = vmatpush1.msra.mxu0 0.0
  %52 = vmatprep.subr.mxu0 0.0
  %53 = vmatpush1.msra.mxu0 0.0
  %54 = vmatprep.subr.mxu0 0.0
  %55 = vmatpush1.msra.mxu0 0.0
  %56 = vmatprep.subr.mxu0 0.0
  %57 = vmatpush1.msra.mxu0 0.0
  %58 = vmatprep.subr.mxu0 0.0
  %59 = vmatpush1.msra.mxu0 0.0
  %60 = vmatprep.subr.mxu0 0.0
  %61 = vmatpush1.msra.mxu0 0.0
  %62 = vmatprep.subr.mxu0 0.0
  %63 = vmatpush1.msra.mxu0 0.0
  %64 = vmatprep.subr.mxu0 0.0
  %65 = vmatpush1.msra.mxu0 0.0
  %66 = vmatprep.subr.mxu0 0.0
  %67 = vmatpush1.msra.mxu0 0.0
  %68 = vmatprep.subr.mxu0 0.0
  %69 = vmatpush1.msra.mxu0 0.0
  %70 = vmatprep.subr.mxu0 0.0
  %71 = vmatpush1.msra.mxu0 0.0
  %72 = vmatprep.subr.mxu0 0.0
  %73 = vmatpush1.msra.mxu0 0.0
  %74 = vmatprep.subr.mxu0 0.0
  %75 = vmatpush1.msra.mxu0 0.0
  %76 = vmatprep.subr.mxu0 0.0
  %77 = vmatpush1.msra.mxu0 0.0
  %78 = vmatprep.subr.mxu0 0.0
  %79 = vmatpush1.msra.mxu0 %v46
  %80 = vmatprep.subr.mxu0 0.0
  %81 = vmatpush2.msra.mxu0 0.0
  %82 = vmatprep.subr.mxu0 0.0
  %83 = vmatpush2.msra.mxu0 0.0
  %84 = vmatprep.subr.mxu0 0.0
  %85 = vmatpush2.msra.mxu0 0.0
  %86 = vmatprep.subr.mxu0 0.0
  %87 = vmatpush2.msra.mxu0 0.0
  %88 = vmatprep.subr.mxu0 0.0
  %89 = vmatpush2.msra.mxu0 0.0
  %90 = vmatprep.subr.mxu0 0.0
  %91 = vmatpush2.msra.mxu0 0.0
  %92 = vmatprep.subr.mxu0 0.0
  %93 = vmatpush2.msra.mxu0 0.0
  %94 = vmatprep.subr.mxu0 0.0
  %95 = vmatpush2.msra.mxu0 0.0
  %96 = vmatprep.subr.mxu0 0.0
  %97 = vmatpush2.msra.mxu0 0.0
  %98 = vmatprep.subr.mxu0 0.0
  %99 = vmatpush2.msra.mxu0 0.0
  %100 = vmatprep.subr.mxu0 0.0
  %101 = vmatpush2.msra.mxu0 0.0
  %102 = vmatprep.subr.mxu0 0.0
  %103 = vmatpush2.msra.mxu0 0.0
  %104 = vmatprep.subr.mxu0 0.0
  %105 = vmatpush2.msra.mxu0 0.0
  %106 = vmatprep.subr.mxu0 0.0
  %107 = vmatpush2.msra.mxu0 0.0
  %108 = vmatprep.subr.mxu0 0.0
  %109 = vmatpush2.msra.mxu0 0.0
  %110 = vmatprep.subr.mxu0 0.0
  %111 = vmatpush2.msra.mxu0 0.0
  %112 = vmatprep.mubr.f32.mxu0 0.0
  %113 = vmatmul.mubr.f32.gmra.mxu0 %v42
  %v114 = vpop.f32.mrf.mxu0
  %v115 = vadd.f32 %v38, %v114
  %v116 = vpop.f32.mrf.mxu0
  %117 = vdwg.mxu0
  %v118 = vmax.f32 %v115, 0.0
  %v120 = vlaneseq
  %v121 = vshrl.u32 %v120, 7
  %v122 = vsub.s32 0, %v121
  %v123 = vrot.slane %v32, %v122
  %vm125 = vcmask 523264
  %v127 = vsel %vm125, %v118, 0
  %129 = vmatprep.subr.mxu0 0.0
  %130 = vmatpush1.msra.mxu0 0.0
  %131 = vmatprep.subr.mxu0 0.0
  %132 = vmatpush1.msra.mxu0 0.0
  %133 = vmatprep.subr.mxu0 0.0
  %134 = vmatpush1.msra.mxu0 0.0
  %135 = vmatprep.subr.mxu0 0.0
  %136 = vmatpush1.msra.mxu0 0.0
  %137 = vmatprep.subr.mxu0 0.0
  %138 = vmatpush1.msra.mxu0 0.0
  %139 = vmatprep.subr.mxu0 0.0
  %140 = vmatpush1.msra.mxu0 0.0
  %141 = vmatprep.subr.mxu0 0.0
  %142 = vmatpush1.msra.mxu0 0.0
  %143 = vmatprep.subr.mxu0 0.0
  %144 = vmatpush1.msra.mxu0 0.0
  %145 = vmatprep.subr.mxu0 0.0
  %146 = vmatpush1.msra.mxu0 %v31
  %147 = vmatprep.subr.mxu0 0.0
  %148 = vmatpush1.msra.mxu0 %v30
  %149 = vmatprep.subr.mxu0 0.0
  %150 = vmatpush1.msra.mxu0 %v29
  %151 = vmatprep.subr.mxu0 0.0
  %152 = vmatpush1.msra.mxu0 %v28
  %153 = vmatprep.subr.mxu0 0.0
  %154 = vmatpush1.msra.mxu0 %v27
  %155 = vmatprep.subr.mxu0 0.0
  %156 = vmatpush1.msra.mxu0 %v26
  %157 = vmatprep.subr.mxu0 0.0
  %158 = vmatpush1.msra.mxu0 %v25
  %159 = vmatprep.subr.mxu0 0.0
  %160 = vmatpush1.msra.mxu0 %v24
  %161 = vmatprep.subr.mxu0 0.0
  %162 = vmatpush2.msra.mxu0 0.0
  %163 = vmatprep.subr.mxu0 0.0
  %164 = vmatpush2.msra.mxu0 0.0
  %165 = vmatprep.subr.mxu0 0.0
  %166 = vmatpush2.msra.mxu0 0.0
  %167 = vmatprep.subr.mxu0 0.0
  %168 = vmatpush2.msra.mxu0 0.0
  %169 = vmatprep.subr.mxu0 0.0
  %170 = vmatpush2.msra.mxu0 0.0
  %171 = vmatprep.subr.mxu0 0.0
  %172 = vmatpush2.msra.mxu0 0.0
  %173 = vmatprep.subr.mxu0 0.0
  %174 = vmatpush2.msra.mxu0 0.0
  %175 = vmatprep.subr.mxu0 0.0
  %176 = vmatpush2.msra.mxu0 0.0
  %177 = vmatprep.subr.mxu0 0.0
  %178 = vmatpush2.msra.mxu0 0.0
  %179 = vmatprep.subr.mxu0 0.0
  %180 = vmatpush2.msra.mxu0 0.0
  %181 = vmatprep.subr.mxu0 0.0
  %182 = vmatpush2.msra.mxu0 0.0
  %183 = vmatprep.subr.mxu0 0.0
  %184 = vmatpush2.msra.mxu0 0.0
  %185 = vmatprep.subr.mxu0 0.0
  %186 = vmatpush2.msra.mxu0 0.0
  %187 = vmatprep.subr.mxu0 0.0
  %188 = vmatpush2.msra.mxu0 0.0
  %189 = vmatprep.subr.mxu0 0.0
  %190 = vmatpush2.msra.mxu0 0.0
  %191 = vmatprep.subr.mxu0 0.0
  %192 = vmatpush2.msra.mxu0 0.0
  %193 = vmatprep.mubr.f32.mxu0 0.0
  %194 = vmatmul.mubr.f32.gmra.mxu0 %v127
  %v195 = vpop.f32.mrf.mxu0
  %v196 = vadd.f32 %v123, %v195
  %v197 = vpop.f32.mrf.mxu0
  %198 = vdwg.mxu0
  %vm199 = vcmask 7168
  %200 = vst.msk [vmem:[%s5] sm:$0xff] %vm199, %v196
  // Predicated region
  $region22: #{tpu_custom_call.1} parent=0 // pred_check
    _
  $region23: #{tpu_custom_call.1} parent=0 // pred_check_branch
    %202 = sbr.rel (0) target = $region25
  $region24: #{tpu_custom_call.1} parent=0 // pred_region
    _
  $region25: #{tpu_custom_call.1} parent=0 // pred_fallthru
    _
  // Predicated region
  $region26: #{tpu_custom_call.1} parent=0 // pred_check
    _
  $region27: #{tpu_custom_call.1} parent=0 // pred_check_branch
    %204 = sbr.rel (0) target = $region29
  $region28: #{tpu_custom_call.1} parent=0 // pred_region
    _
  $region29: #{tpu_custom_call.1} parent=0 // pred_fallthru
    _

</llo_original>
